<compile_context>
chip_gen: v6e
topology: v6e:2x2x1
jax: 0.10.0
libtpu: 0.0.40
codegen_flags: <defaults>
</compile_context>

<pallas_src>
import functools

import numpy as np
import jax
import jax.numpy as jnp
from jax.experimental import pallas as pl
from jax.experimental.pallas import tpu as pltpu

_LN_EPS = 1e-5                      # nn.LayerNorm default
_SQRT_2_OVER_PI = 0.7978845608028654


def _round_up(n, m):
    return ((n + m - 1) // m) * m


def _nan_guard(x):
    # torch.nan_to_num(x, nan=0.0, posinf=1.0, neginf=-1.0); identity on finite values.
    x = jnp.where(jnp.isnan(x), 0.0, x)
    x = jnp.where(x == jnp.inf, 1.0, x)
    x = jnp.where(x == -jnp.inf, -1.0, x)
    return x


def _gelu_tanh(x):
    # tanh-form GELU (max abs deviation from exact erf GELU ~1e-3); tanh -> EUP slot.
    return 0.5 * x * (1.0 + jnp.tanh(_SQRT_2_OVER_PI * (x + 0.044715 * x * x * x)))


def _layernorm(h, gamma, beta):
    # Fused single-pass mean/var: var = E[h^2] - E[h]^2 (saves one full-width
    # subtract + one extra reduction input pass per normalization).
    mu = jnp.mean(h, axis=-1, keepdims=True)
    ms = jnp.mean(h * h, axis=-1, keepdims=True)
    var = jnp.maximum(ms - mu * mu, 0.0)
    return (h - mu) * jax.lax.rsqrt(var + _LN_EPS) * gamma + beta


def _mxu(a_f32, w_bf16):
    # Single-pass bf16 MXU matmul with f32 accumulation.
    return jnp.dot(a_f32.astype(jnp.bfloat16), w_bf16,
                   preferred_element_type=jnp.float32)


def _fdd_kernel(x_ref, wenc_ref, wbig_ref, vecs_ref,
                hi_out, lo_out, freq_out, *, d_pad):
    D = x_ref.shape[-1]

    # Packed (16, D) bias/gamma/beta table, statically indexed.
    benc, genc, beenc = vecs_ref[0:1, :], vecs_ref[1:2, :], vecs_ref[2:3, :]
    bhi, ghi, behi = vecs_ref[3:4, :], vecs_ref[4:5, :], vecs_ref[5:6, :]
    blo, glo, belo = vecs_ref[6:7, :], vecs_ref[7:8, :], vecs_ref[8:9, :]

    x = _nan_guard(x_ref[...])

    # encoder: Linear -> LayerNorm -> GELU
    h = _mxu(x, wenc_ref[...]) + benc
    h = _layernorm(h, genc, beenc)
    h = _gelu_tanh(h)
    # (post-GELU nan-guard removed: LN+GELU of finite input is provably finite)

    # whitening over the feature axis (torch.std is unbiased, ddof=1), fused
    # single-pass mean / mean-of-squares.
    mu = jnp.mean(h, axis=-1, keepdims=True)
    ms = jnp.mean(h * h, axis=-1, keepdims=True)
    var = jnp.maximum(ms - mu * mu, 0.0) * (float(D) / float(D - 1))
    std = jnp.sqrt(var) + 1e-6
    norm = (h - mu) * pl.reciprocal(std, approx=True)   # EUP reciprocal

    # One wide shared-LHS MXU pass over lane-aligned sections:
    #   [0 : D)                      irfft(mask_lo*scale*rfft(.)) @ W_hi   (fused offline)
    #   [d_pad : d_pad+D)            irfft(mask_hi*rfft(.)) @ W_lo         (fused offline)
    #   [2*d_pad : 2*d_pad+f_pad)    [Re rfft | Im rfft | 0-pad]           (ortho DFT)
    big = _mxu(norm, wbig_ref[...])                      # (TB, 2*d_pad + f_pad)

    hi = big[:, :D] + bhi
    hi_out[...] = _layernorm(hi, ghi, behi)

    lo = big[:, d_pad:d_pad + D] + blo
    lo_out[...] = _layernorm(lo, glo, belo)

    freq_out[...] = big[:, 2 * d_pad:]                   # lane-dense padded slab


def _vmem_capacity_bytes():
    try:
        return int(pltpu.get_tpu_info().vmem_capacity_bytes)
    except Exception:
        return 64 << 20        # conservative fallback (v7x per-TC VMEM)


def _per_row_bytes(D, d_pad, f_pad):
    # double-buffered activation tiles (x, hi, lo, freq) + in-kernel temporaries, f32
    act = 2 * (3 * D + f_pad) * 4
    tmp = (4 * D + 2 * (2 * d_pad + f_pad)) * 4
    return act + tmp


def _pick_block_b(B, D, d_pad, f_pad, weight_bytes):
    budget = int(_vmem_capacity_bytes() * 0.6) - weight_bytes
    per_row = _per_row_bytes(D, d_pad, f_pad)
    best = 8
    for cand in (1024, 512, 256, 128, 64, 32, 16, 8):
        if cand * per_row <= budget:
            best = cand
            break
    block_b = min(B, best)
    if block_b < B:
        block_b = max(8, (block_b // 8) * 8)   # sublane-aligned tiles
    return block_b


def _vmem_limit_bytes(weights, block_b, D, d_pad, f_pad):
    weight_bytes = sum(int(np.prod(w.shape)) * w.dtype.itemsize for w in weights)
    est = weight_bytes + block_b * _per_row_bytes(D, d_pad, f_pad) + (4 << 20)
    cap = int(_vmem_capacity_bytes() * 0.85)
    return int(min(max(est, 32 << 20), cap))


def frequency_domain_decoupler(x, fused, *, block_b=None):
    """x: (B, D) float32, fused: dict from fuse_params().
    Returns (high_freq_repr, low_freq_repr, freq_domain[complex64])."""
    B, D = x.shape
    assert D >= 2, "whitening uses ddof=1; need D >= 2"
    F, d_pad, f_pad = fused["F"], fused["d_pad"], fused["f_pad"]

    weights = (fused["wenc"], fused["w_big"], fused["vecs"])
    weight_bytes = sum(int(np.prod(w.shape)) * w.dtype.itemsize for w in weights)

    if block_b is None:
        block_b = _pick_block_b(B, D, d_pad, f_pad, weight_bytes)
    block_b = min(block_b, B)
    if block_b < B and block_b % 8 != 0:
        block_b = max(8, (block_b // 8) * 8)
    grid = (pl.cdiv(B, block_b),)

    def _wspec(a):
        nd = a.ndim
        # Grid-invariant, VMEM-resident, single-buffered weight.
        # TODO(synk): N/K-tile or stream (emit_pipeline) when weights no longer fit VMEM.
        return pl.BlockSpec(a.shape, lambda i, _nd=nd: (0,) * _nd,
                            pipeline_mode=pl.Buffered(1))

    in_specs = [pl.BlockSpec((block_b, D), lambda i: (i, 0))] + [_wspec(w) for w in weights]
    out_specs = [
        pl.BlockSpec((block_b, D), lambda i: (i, 0)),
        pl.BlockSpec((block_b, D), lambda i: (i, 0)),
        pl.BlockSpec((block_b, f_pad), lambda i: (i, 0)),
    ]
    out_shape = (
        jax.ShapeDtypeStruct((B, D), jnp.float32),
        jax.ShapeDtypeStruct((B, D), jnp.float32),
        jax.ShapeDtypeStruct((B, f_pad), jnp.float32),
    )

    hi, lo, freqs = pl.pallas_call(
        functools.partial(_fdd_kernel, d_pad=d_pad),
        out_shape=out_shape,
        grid=grid,
        in_specs=in_specs,
        out_specs=out_specs,
        compiler_params=pltpu.CompilerParams(
            dimension_semantics=("parallel",),
            vmem_limit_bytes=_vmem_limit_bytes(weights, block_b, D, d_pad, f_pad)),
    )(x, *weights)

    # Slice the lane-dense padded freq slab back to F real / F imag columns.
    freq_domain = jax.lax.complex(freqs[:, :F], freqs[:, F:2 * F])   # complex64
    return hi, lo, freq_domain


def make_params(key, D):
    """Learnable parameters of the module (Linear weights pre-transposed: y = x @ W + b)."""
    ks = jax.random.split(key, 6)
    bound = 1.0 / np.sqrt(D)

    def uni(k, shape):
        return jax.random.uniform(k, shape, jnp.float32, -bound, bound)

    return dict(
        wenc=uni(ks[0], (D, D)), benc=uni(ks[1], (1, D)),
        genc=jnp.ones((1, D), jnp.float32), beenc=jnp.zeros((1, D), jnp.float32),
        whi=uni(ks[2], (D, D)), bhi=uni(ks[3], (1, D)),
        ghi=jnp.ones((1, D), jnp.float32), behi=jnp.zeros((1, D), jnp.float32),
        wlo=uni(ks[4], (D, D)), blo=uni(ks[5], (1, D)),
        glo=jnp.ones((1, D), jnp.float32), belo=jnp.zeros((1, D), jnp.float32),
    )


def fuse_params(params, cutoff_ratio=0.6, high_freq_scale=1.5, lane_multiple=128):
    """Offline: build DFT / band-filter matrices in float64, fuse the filters into the
    projector weights, concatenate the shared-LHS RHS matrices with each section
    zero-padded to a lane multiple (use 256 on v6e/v7x for full MXU N tiles), pack the
    nine (1,D) vectors into one (16,D) table, and cast MXU weights to bf16."""
    whi = np.asarray(params["whi"], np.float64)
    wlo = np.asarray(params["wlo"], np.float64)
    D = whi.shape[0]
    F = D // 2 + 1
    cutoff = int(F * cutoff_ratio)

    eye = np.eye(D, dtype=np.float64)
    Fmat = np.fft.rfft(eye, axis=1, norm="ortho")               # (D, F) complex

    mask_keep_low = np.zeros((F,), dtype=np.float64)
    mask_keep_low[:cutoff] = 1.0                                # "high_freq" branch keeps bins < cutoff
    a_hi = np.fft.irfft(Fmat * (mask_keep_low * high_freq_scale), n=D, axis=1, norm="ortho")
    a_lo = np.fft.irfft(Fmat * (1.0 - mask_keep_low), n=D, axis=1, norm="ortho")

    d_pad = _round_up(D, lane_multiple)
    f_pad = _round_up(2 * F, lane_multiple)

    w_big = np.zeros((D, 2 * d_pad + f_pad), np.float64)
    w_big[:, :D] = a_hi @ whi
    w_big[:, d_pad:d_pad + D] = a_lo @ wlo
    w_big[:, 2 * d_pad:2 * d_pad + F] = Fmat.real
    w_big[:, 2 * d_pad + F:2 * d_pad + 2 * F] = Fmat.imag

    vecs = np.zeros((16, D), np.float32)
    for i, k in enumerate(("benc", "genc", "beenc",
                           "bhi", "ghi", "behi",
                           "blo", "glo", "belo")):
        vecs[i] = np.asarray(params[k], np.float32).reshape(-1)

    return dict(
        wenc=params["wenc"].astype(jnp.bfloat16),
        w_big=jnp.asarray(w_big, jnp.bfloat16),
        vecs=jnp.asarray(vecs),
        D=D, F=F, d_pad=d_pad, f_pad=f_pad,
    )


def _layernorm_ref(h, gamma, beta):
    mu = jnp.mean(h, axis=-1, keepdims=True)
    var = jnp.mean((h - mu) ** 2, axis=-1, keepdims=True)
    return (h - mu) * jax.lax.rsqrt(var + _LN_EPS) * gamma + beta


def reference(x, params, cutoff_ratio=0.6, high_freq_scale=1.5):
    """Pure-JAX reference mirroring the PyTorch forward (real FFTs, exact GELU, f32)."""
    D = x.shape[-1]
    F = D // 2 + 1
    cutoff = int(F * cutoff_ratio)

    x = jnp.nan_to_num(x, nan=0.0, posinf=1.0, neginf=-1.0)
    h = x @ params["wenc"] + params["benc"]
    h = _layernorm_ref(h, params["genc"], params["beenc"])
    h = jax.nn.gelu(h, approximate=False)
    h = jnp.nan_to_num(h, nan=0.0, posinf=1.0, neginf=-1.0)

    mu = jnp.mean(h, axis=-1, keepdims=True)
    std = jnp.sqrt(jnp.sum((h - mu) ** 2, axis=-1, keepdims=True) / (D - 1)) + 1e-6
    norm = (h - mu) / std

    fd = jnp.fft.rfft(norm, axis=-1, norm="ortho")
    idx = jnp.arange(F)
    hi_fd = jnp.where(idx < cutoff, fd, 0.0) * high_freq_scale
    lo_fd = jnp.where(idx >= cutoff, fd, 0.0)
    hi_repr = jnp.fft.irfft(hi_fd, n=D, axis=-1, norm="ortho")
    lo_repr = jnp.fft.irfft(lo_fd, n=D, axis=-1, norm="ortho")

    hi = _layernorm_ref(hi_repr @ params["whi"] + params["bhi"], params["ghi"], params["behi"])
    lo = _layernorm_ref(lo_repr @ params["wlo"] + params["blo"], params["glo"], params["belo"])
    return hi, lo, fd


if __name__ == "__main__":
    B, D = 16, 32   # embedding_dim = 32; block_b=8 -> 2 grid steps exercise the pipeline
    key = jax.random.PRNGKey(0)
    kx, kp = jax.random.split(key)

    x = jax.random.normal(kx, (B, D), jnp.float32)
    params = make_params(kp, D)
    fused = fuse_params(params)

    hi, lo, fd = frequency_domain_decoupler(x, fused, block_b=8)
    jax.block_until_ready((hi, lo, fd))

    hi_r, lo_r, fd_r = reference(x, params)
    # bf16 MXU operands + tanh-GELU + approx reciprocal vs. the f32/erf/FFT reference:
    # 2e-2 abs/rel gives comfortable headroom while still validating the math.
    np.testing.assert_allclose(np.asarray(hi), np.asarray(hi_r), atol=2e-2, rtol=2e-2)
    np.testing.assert_allclose(np.asarray(lo), np.asarray(lo_r), atol=2e-2, rtol=2e-2)
    np.testing.assert_allclose(np.asarray(fd), np.asarray(fd_r), atol=2e-2, rtol=2e-2)

    print("KERNEL_OK")
</pallas_src>

<mosaic_0001>
module attributes {stable_mosaic.version = 11 : i64} {
  func.func @_fdd_kernel(%arg0: i32, %arg1: memref<8x32xf32, #tpu.memory_space<vmem>>, %arg2: memref<32x32xbf16, #tpu.memory_space<vmem>>, %arg3: memref<32x384xbf16, #tpu.memory_space<vmem>>, %arg4: memref<16x32xf32, #tpu.memory_space<vmem>>, %arg5: memref<8x32xf32, #tpu.memory_space<vmem>>, %arg6: memref<8x32xf32, #tpu.memory_space<vmem>>, %arg7: memref<8x128xf32, #tpu.memory_space<vmem>>) attributes {dimension_semantics = [#tpu.dimension_semantics<parallel>], iteration_bounds = array<i64: 2>, scalar_prefetch = 0 : i64, scratch_operands = 0 : i64, tpu.core_type = #tpu.core_type<tc>, window_params = [{transform_indices = @transform_0, window_bounds = array<i64: 8, 32>}, {pipeline_mode = #tpu.pipeline_mode<synchronous>, transform_indices = @transform_1, window_bounds = array<i64: 32, 32>}, {pipeline_mode = #tpu.pipeline_mode<synchronous>, transform_indices = @transform_2, window_bounds = array<i64: 32, 384>}, {pipeline_mode = #tpu.pipeline_mode<synchronous>, transform_indices = @transform_3, window_bounds = array<i64: 16, 32>}, {transform_indices = @transform_4, window_bounds = array<i64: 8, 32>}, {transform_indices = @transform_5, window_bounds = array<i64: 8, 32>}, {transform_indices = @transform_6, window_bounds = array<i64: 8, 128>}]} {
    %c0 = arith.constant 0 : index
    %c0_0 = arith.constant 0 : index
    %0 = vector.load %arg4[%c0, %c0_0] : memref<16x32xf32, #tpu.memory_space<vmem>>, vector<1x32xf32>
    %c1 = arith.constant 1 : index
    %c0_1 = arith.constant 0 : index
    %1 = vector.load %arg4[%c1, %c0_1] : memref<16x32xf32, #tpu.memory_space<vmem>>, vector<1x32xf32>
    %c2 = arith.constant 2 : index
    %c0_2 = arith.constant 0 : index
    %2 = vector.load %arg4[%c2, %c0_2] : memref<16x32xf32, #tpu.memory_space<vmem>>, vector<1x32xf32>
    %c3 = arith.constant 3 : index
    %c0_3 = arith.constant 0 : index
    %3 = vector.load %arg4[%c3, %c0_3] : memref<16x32xf32, #tpu.memory_space<vmem>>, vector<1x32xf32>
    %c4 = arith.constant 4 : index
    %c0_4 = arith.constant 0 : index
    %4 = vector.load %arg4[%c4, %c0_4] : memref<16x32xf32, #tpu.memory_space<vmem>>, vector<1x32xf32>
    %c5 = arith.constant 5 : index
    %c0_5 = arith.constant 0 : index
    %5 = vector.load %arg4[%c5, %c0_5] : memref<16x32xf32, #tpu.memory_space<vmem>>, vector<1x32xf32>
    %c6 = arith.constant 6 : index
    %c0_6 = arith.constant 0 : index
    %6 = vector.load %arg4[%c6, %c0_6] : memref<16x32xf32, #tpu.memory_space<vmem>>, vector<1x32xf32>
    %c7 = arith.constant 7 : index
    %c0_7 = arith.constant 0 : index
    %7 = vector.load %arg4[%c7, %c0_7] : memref<16x32xf32, #tpu.memory_space<vmem>>, vector<1x32xf32>
    %c8 = arith.constant 8 : index
    %c0_8 = arith.constant 0 : index
    %8 = vector.load %arg4[%c8, %c0_8] : memref<16x32xf32, #tpu.memory_space<vmem>>, vector<1x32xf32>
    %c0_9 = arith.constant 0 : index
    %c0_10 = arith.constant 0 : index
    %9 = vector.load %arg1[%c0_9, %c0_10] : memref<8x32xf32, #tpu.memory_space<vmem>>, vector<8x32xf32>
    %10 = arith.cmpf one, %9, %9 : vector<8x32xf32>
    %cst = arith.constant 0.000000e+00 : f32
    %11 = vector.broadcast %cst : f32 to vector<8x32xf32>
    %12 = arith.select %10, %11, %9 : vector<8x32xi1>, vector<8x32xf32>
    %cst_11 = arith.constant 0x7F800000 : f32
    %13 = vector.broadcast %cst_11 : f32 to vector<8x32xf32>
    %14 = arith.cmpf oeq, %12, %13 : vector<8x32xf32>
    %cst_12 = arith.constant 1.000000e+00 : f32
    %15 = vector.broadcast %cst_12 : f32 to vector<8x32xf32>
    %16 = arith.select %14, %15, %12 : vector<8x32xi1>, vector<8x32xf32>
    %cst_13 = arith.constant 0xFF800000 : f32
    %17 = vector.broadcast %cst_13 : f32 to vector<8x32xf32>
    %18 = arith.cmpf oeq, %16, %17 : vector<8x32xf32>
    %cst_14 = arith.constant -1.000000e+00 : f32
    %19 = vector.broadcast %cst_14 : f32 to vector<8x32xf32>
    %20 = arith.select %18, %19, %16 : vector<8x32xi1>, vector<8x32xf32>
    %c0_15 = arith.constant 0 : index
    %c0_16 = arith.constant 0 : index
    %21 = vector.load %arg2[%c0_15, %c0_16] : memref<32x32xbf16, #tpu.memory_space<vmem>>, vector<32x32xbf16>
    %22 = arith.truncf %20 : vector<8x32xf32> to vector<8x32xbf16>
    %cst_17 = arith.constant dense<0.000000e+00> : vector<8x32xf32>
    %23 = tpu.matmul %22, %21, %cst_17 {dimension_numbers = #tpu.dot_dimension_numbers<[1], [0], [0], [1], [0, 0, 1, 1], [], []>} : vector<8x32xbf16>, vector<32x32xbf16>, vector<8x32xf32> -> vector<8x32xf32>
    %24 = vector.broadcast %0 : vector<1x32xf32> to vector<8x32xf32>
    %25 = arith.addf %23, %24 : vector<8x32xf32>
    %cst_18 = arith.constant dense<0.000000e+00> : vector<8xf32>
    %26 = vector.multi_reduction <add>, %25, %cst_18 [1] : vector<8x32xf32> to vector<8xf32>
    %27 = vector.shape_cast %26 : vector<8xf32> to vector<8x1xf32>
    %cst_19 = arith.constant 3.200000e+01 : f32
    %28 = vector.broadcast %cst_19 : f32 to vector<8x1xf32>
    %29 = arith.divf %27, %28 : vector<8x1xf32>
    %30 = arith.mulf %25, %25 : vector<8x32xf32>
    %cst_20 = arith.constant dense<0.000000e+00> : vector<8xf32>
    %31 = vector.multi_reduction <add>, %30, %cst_20 [1] : vector<8x32xf32> to vector<8xf32>
    %32 = vector.shape_cast %31 : vector<8xf32> to vector<8x1xf32>
    %cst_21 = arith.constant 3.200000e+01 : f32
    %33 = vector.broadcast %cst_21 : f32 to vector<8x1xf32>
    %34 = arith.divf %32, %33 : vector<8x1xf32>
    %35 = arith.mulf %29, %29 : vector<8x1xf32>
    %36 = arith.subf %34, %35 : vector<8x1xf32>
    %cst_22 = arith.constant 0.000000e+00 : f32
    %37 = vector.broadcast %cst_22 : f32 to vector<8x1xf32>
    %38 = arith.maximumf %36, %37 : vector<8x1xf32>
    %39 = vector.broadcast %29 : vector<8x1xf32> to vector<8x32xf32>
    %40 = arith.subf %25, %39 : vector<8x32xf32>
    %cst_23 = arith.constant 9.99999974E-6 : f32
    %41 = vector.broadcast %cst_23 : f32 to vector<8x1xf32>
    %42 = arith.addf %38, %41 : vector<8x1xf32>
    %43 = math.rsqrt %42 : vector<8x1xf32>
    %44 = vector.broadcast %43 : vector<8x1xf32> to vector<8x32xf32>
    %45 = arith.mulf %40, %44 : vector<8x32xf32>
    %46 = vector.broadcast %1 : vector<1x32xf32> to vector<8x32xf32>
    %47 = arith.mulf %45, %46 : vector<8x32xf32>
    %48 = vector.broadcast %2 : vector<1x32xf32> to vector<8x32xf32>
    %49 = arith.addf %47, %48 : vector<8x32xf32>
    %cst_24 = arith.constant 5.000000e-01 : f32
    %50 = vector.broadcast %cst_24 : f32 to vector<8x32xf32>
    %51 = arith.mulf %50, %49 : vector<8x32xf32>
    %cst_25 = arith.constant 4.471500e-02 : f32
    %52 = vector.broadcast %cst_25 : f32 to vector<8x32xf32>
    %53 = arith.mulf %52, %49 : vector<8x32xf32>
    %54 = arith.mulf %53, %49 : vector<8x32xf32>
    %55 = arith.mulf %54, %49 : vector<8x32xf32>
    %56 = arith.addf %49, %55 : vector<8x32xf32>
    %cst_26 = arith.constant 0.797884583 : f32
    %57 = vector.broadcast %cst_26 : f32 to vector<8x32xf32>
    %58 = arith.mulf %57, %56 : vector<8x32xf32>
    %59 = math.tanh %58 : vector<8x32xf32>
    %cst_27 = arith.constant 1.000000e+00 : f32
    %60 = vector.broadcast %cst_27 : f32 to vector<8x32xf32>
    %61 = arith.addf %60, %59 : vector<8x32xf32>
    %62 = arith.mulf %51, %61 : vector<8x32xf32>
    %cst_28 = arith.constant dense<0.000000e+00> : vector<8xf32>
    %63 = vector.multi_reduction <add>, %62, %cst_28 [1] : vector<8x32xf32> to vector<8xf32>
    %64 = vector.shape_cast %63 : vector<8xf32> to vector<8x1xf32>
    %cst_29 = arith.constant 3.200000e+01 : f32
    %65 = vector.broadcast %cst_29 : f32 to vector<8x1xf32>
    %66 = arith.divf %64, %65 : vector<8x1xf32>
    %67 = arith.mulf %62, %62 : vector<8x32xf32>
    %cst_30 = arith.constant dense<0.000000e+00> : vector<8xf32>
    %68 = vector.multi_reduction <add>, %67, %cst_30 [1] : vector<8x32xf32> to vector<8xf32>
    %69 = vector.shape_cast %68 : vector<8xf32> to vector<8x1xf32>
    %cst_31 = arith.constant 3.200000e+01 : f32
    %70 = vector.broadcast %cst_31 : f32 to vector<8x1xf32>
    %71 = arith.divf %69, %70 : vector<8x1xf32>
    %72 = arith.mulf %66, %66 : vector<8x1xf32>
    %73 = arith.subf %71, %72 : vector<8x1xf32>
    %cst_32 = arith.constant 0.000000e+00 : f32
    %74 = vector.broadcast %cst_32 : f32 to vector<8x1xf32>
    %75 = arith.maximumf %73, %74 : vector<8x1xf32>
    %cst_33 = arith.constant 1.03225803 : f32
    %76 = vector.broadcast %cst_33 : f32 to vector<8x1xf32>
    %77 = arith.mulf %75, %76 : vector<8x1xf32>
    %78 = math.sqrt %77 : vector<8x1xf32>
    %cst_34 = arith.constant 9.99999997E-7 : f32
    %79 = vector.broadcast %cst_34 : f32 to vector<8x1xf32>
    %80 = arith.addf %78, %79 : vector<8x1xf32>
    %81 = vector.broadcast %66 : vector<8x1xf32> to vector<8x32xf32>
    %82 = arith.subf %62, %81 : vector<8x32xf32>
    %83 = tpu.reciprocal %80 {approx = true} : vector<8x1xf32> -> vector<8x1xf32>
    %84 = vector.broadcast %83 : vector<8x1xf32> to vector<8x32xf32>
    %85 = arith.mulf %82, %84 : vector<8x32xf32>
    %c0_35 = arith.constant 0 : index
    %c0_36 = arith.constant 0 : index
    %86 = vector.load %arg3[%c0_35, %c0_36] : memref<32x384xbf16, #tpu.memory_space<vmem>>, vector<32x384xbf16>
    %87 = arith.truncf %85 : vector<8x32xf32> to vector<8x32xbf16>
    %cst_37 = arith.constant dense<0.000000e+00> : vector<8x384xf32>
    %88 = tpu.matmul %87, %86, %cst_37 {dimension_numbers = #tpu.dot_dimension_numbers<[1], [0], [0], [1], [0, 0, 1, 1], [], []>} : vector<8x32xbf16>, vector<32x384xbf16>, vector<8x384xf32> -> vector<8x384xf32>
    %89 = vector.extract_strided_slice %88 {offsets = [0, 0], sizes = [8, 32], strides = [1, 1]} : vector<8x384xf32> to vector<8x32xf32>
    %90 = vector.broadcast %3 : vector<1x32xf32> to vector<8x32xf32>
    %91 = arith.addf %89, %90 : vector<8x32xf32>
    %cst_38 = arith.constant dense<0.000000e+00> : vector<8xf32>
    %92 = vector.multi_reduction <add>, %91, %cst_38 [1] : vector<8x32xf32> to vector<8xf32>
    %93 = vector.shape_cast %92 : vector<8xf32> to vector<8x1xf32>
    %cst_39 = arith.constant 3.200000e+01 : f32
    %94 = vector.broadcast %cst_39 : f32 to vector<8x1xf32>
    %95 = arith.divf %93, %94 : vector<8x1xf32>
    %96 = arith.mulf %91, %91 : vector<8x32xf32>
    %cst_40 = arith.constant dense<0.000000e+00> : vector<8xf32>
    %97 = vector.multi_reduction <add>, %96, %cst_40 [1] : vector<8x32xf32> to vector<8xf32>
    %98 = vector.shape_cast %97 : vector<8xf32> to vector<8x1xf32>
    %cst_41 = arith.constant 3.200000e+01 : f32
    %99 = vector.broadcast %cst_41 : f32 to vector<8x1xf32>
    %100 = arith.divf %98, %99 : vector<8x1xf32>
    %101 = arith.mulf %95, %95 : vector<8x1xf32>
    %102 = arith.subf %100, %101 : vector<8x1xf32>
    %cst_42 = arith.constant 0.000000e+00 : f32
    %103 = vector.broadcast %cst_42 : f32 to vector<8x1xf32>
    %104 = arith.maximumf %102, %103 : vector<8x1xf32>
    %105 = vector.broadcast %95 : vector<8x1xf32> to vector<8x32xf32>
    %106 = arith.subf %91, %105 : vector<8x32xf32>
    %cst_43 = arith.constant 9.99999974E-6 : f32
    %107 = vector.broadcast %cst_43 : f32 to vector<8x1xf32>
    %108 = arith.addf %104, %107 : vector<8x1xf32>
    %109 = math.rsqrt %108 : vector<8x1xf32>
    %110 = vector.broadcast %109 : vector<8x1xf32> to vector<8x32xf32>
    %111 = arith.mulf %106, %110 : vector<8x32xf32>
    %112 = vector.broadcast %4 : vector<1x32xf32> to vector<8x32xf32>
    %113 = arith.mulf %111, %112 : vector<8x32xf32>
    %114 = vector.broadcast %5 : vector<1x32xf32> to vector<8x32xf32>
    %115 = arith.addf %113, %114 : vector<8x32xf32>
    %c0_44 = arith.constant 0 : index
    %c0_45 = arith.constant 0 : index
    %116 = vector.load %arg5[%c0_44, %c0_45] : memref<8x32xf32, #tpu.memory_space<vmem>>, vector<8x32xf32>
    tpu.vector_store %arg5[%c0_44, %c0_45], %115 {strides = array<i32>} : memref<8x32xf32, #tpu.memory_space<vmem>>, vector<8x32xf32>,
    %117 = vector.extract_strided_slice %88 {offsets = [0, 128], sizes = [8, 32], strides = [1, 1]} : vector<8x384xf32> to vector<8x32xf32>
    %118 = vector.broadcast %6 : vector<1x32xf32> to vector<8x32xf32>
    %119 = arith.addf %117, %118 : vector<8x32xf32>
    %cst_46 = arith.constant dense<0.000000e+00> : vector<8xf32>
    %120 = vector.multi_reduction <add>, %119, %cst_46 [1] : vector<8x32xf32> to vector<8xf32>
    %121 = vector.shape_cast %120 : vector<8xf32> to vector<8x1xf32>
    %cst_47 = arith.constant 3.200000e+01 : f32
    %122 = vector.broadcast %cst_47 : f32 to vector<8x1xf32>
    %123 = arith.divf %121, %122 : vector<8x1xf32>
    %124 = arith.mulf %119, %119 : vector<8x32xf32>
    %cst_48 = arith.constant dense<0.000000e+00> : vector<8xf32>
    %125 = vector.multi_reduction <add>, %124, %cst_48 [1] : vector<8x32xf32> to vector<8xf32>
    %126 = vector.shape_cast %125 : vector<8xf32> to vector<8x1xf32>
    %cst_49 = arith.constant 3.200000e+01 : f32
    %127 = vector.broadcast %cst_49 : f32 to vector<8x1xf32>
    %128 = arith.divf %126, %127 : vector<8x1xf32>
    %129 = arith.mulf %123, %123 : vector<8x1xf32>
    %130 = arith.subf %128, %129 : vector<8x1xf32>
    %cst_50 = arith.constant 0.000000e+00 : f32
    %131 = vector.broadcast %cst_50 : f32 to vector<8x1xf32>
    %132 = arith.maximumf %130, %131 : vector<8x1xf32>
    %133 = vector.broadcast %123 : vector<8x1xf32> to vector<8x32xf32>
    %134 = arith.subf %119, %133 : vector<8x32xf32>
    %cst_51 = arith.constant 9.99999974E-6 : f32
    %135 = vector.broadcast %cst_51 : f32 to vector<8x1xf32>
    %136 = arith.addf %132, %135 : vector<8x1xf32>
    %137 = math.rsqrt %136 : vector<8x1xf32>
    %138 = vector.broadcast %137 : vector<8x1xf32> to vector<8x32xf32>
    %139 = arith.mulf %134, %138 : vector<8x32xf32>
    %140 = vector.broadcast %7 : vector<1x32xf32> to vector<8x32xf32>
    %141 = arith.mulf %139, %140 : vector<8x32xf32>
    %142 = vector.broadcast %8 : vector<1x32xf32> to vector<8x32xf32>
    %143 = arith.addf %141, %142 : vector<8x32xf32>
    %c0_52 = arith.constant 0 : index
    %c0_53 = arith.constant 0 : index
    %144 = vector.load %arg6[%c0_52, %c0_53] : memref<8x32xf32, #tpu.memory_space<vmem>>, vector<8x32xf32>
    tpu.vector_store %arg6[%c0_52, %c0_53], %143 {strides = array<i32>} : memref<8x32xf32, #tpu.memory_space<vmem>>, vector<8x32xf32>,
    %145 = vector.extract_strided_slice %88 {offsets = [0, 256], sizes = [8, 128], strides = [1, 1]} : vector<8x384xf32> to vector<8x128xf32>
    %c0_54 = arith.constant 0 : index
    %c0_55 = arith.constant 0 : index
    %146 = vector.load %arg7[%c0_54, %c0_55] : memref<8x128xf32, #tpu.memory_space<vmem>>, vector<8x128xf32>
    tpu.vector_store %arg7[%c0_54, %c0_55], %145 {strides = array<i32>} : memref<8x128xf32, #tpu.memory_space<vmem>>, vector<8x128xf32>,
    return
  }
  func.func @transform_0(%arg0: i32) -> (i32, i32) {
    %c0_i32 = arith.constant 0 : i32
    %c0_i32_0 = arith.constant 0 : i32
    return %arg0, %c0_i32 : i32, i32
  }
  func.func @transform_1(%arg0: i32) -> (i32, i32) {
    %c0_i32 = arith.constant 0 : i32
    %c0_i32_0 = arith.constant 0 : i32
    %c0_i32_1 = arith.constant 0 : i32
    return %c0_i32, %c0_i32_0 : i32, i32
  }
  func.func @transform_2(%arg0: i32) -> (i32, i32) {
    %c0_i32 = arith.constant 0 : i32
    %c0_i32_0 = arith.constant 0 : i32
    %c0_i32_1 = arith.constant 0 : i32
    return %c0_i32, %c0_i32_0 : i32, i32
  }
  func.func @transform_3(%arg0: i32) -> (i32, i32) {
    %c0_i32 = arith.constant 0 : i32
    %c0_i32_0 = arith.constant 0 : i32
    %c0_i32_1 = arith.constant 0 : i32
    return %c0_i32, %c0_i32_0 : i32, i32
  }
  func.func @transform_4(%arg0: i32) -> (i32, i32) {
    %c0_i32 = arith.constant 0 : i32
    %c0_i32_0 = arith.constant 0 : i32
    return %arg0, %c0_i32 : i32, i32
  }
  func.func @transform_5(%arg0: i32) -> (i32, i32) {
    %c0_i32 = arith.constant 0 : i32
    %c0_i32_0 = arith.constant 0 : i32
    return %arg0, %c0_i32 : i32, i32
  }
  func.func @transform_6(%arg0: i32) -> (i32, i32) {
    %c0_i32 = arith.constant 0 : i32
    %c0_i32_0 = arith.constant 0 : i32
    return %arg0, %c0_i32 : i32, i32
  }
}

</mosaic_0001>

<llo_original>
// kernel: tpu_custom_call.1
$region0: #{tpu_custom_call.1}
  #allocation0 [shape = 'u32[]', space=smem, size = 0x4, offset = 0x4, fixed_abs, tag = 'smem constant byte address 0x4 - core index']
  #allocation1 [shape = 'u32[144,128]{1,0:T(1,128)}', space=vmem, size = 0x12000, scoped, tag = 'internal scratch']
  %s0 = inlined_call_operand.hbm [shape: f32[16,32], index: 0, kind: input, shape index: {}]
  %s1 = inlined_call_operand.hbm [shape: bf16[32,32], index: 1, kind: input, shape index: {}]
  %s2 = inlined_call_operand.hbm [shape: bf16[32,384], index: 2, kind: input, shape index: {}]
  %s3 = inlined_call_operand.hbm [shape: f32[16,32], index: 3, kind: input, shape index: {}]
  %s4 = inlined_call_operand.hbm [shape: f32[16,32], index: 4, kind: output, shape index: {0}]
  %s5 = inlined_call_operand.hbm [shape: f32[16,32], index: 5, kind: output, shape index: {1}]
  %s6 = inlined_call_operand.hbm [shape: f32[16,128], index: 6, kind: output, shape index: {2}]
  %7 = xla_tuple %s4, %s5, %s6
  %s8 = sld [smem:[#allocation0]]
  $region81: #{tpu_custom_call.1} parent=0
    _
  %s10 = ssub.s32 1, %s8
  %s11 = scalar_select 0, %s10, %s8
  $region1: #{tpu_custom_call.1} parent=0
    #allocation2 [shape = 'u8[8192]{0}', space=vmem, size = 0x2000, scoped, tag = 'input window, operand 0']
    #allocation3 [shape = 's32[2]{0}', space=sflag, size = 0x8, scoped, tag = 'scoped memory for tpu_custom_call.1']
    #allocation4 [shape = 's32[2]{0}', space=sflag, size = 0x8, scoped, tag = 'scoped memory for tpu_custom_call.1']
    #allocation5 [shape = 'u8[8192]{0}', space=vmem, size = 0x2000, scoped, tag = 'input window, operand 1, single buffered']
    #allocation6 [shape = 's32[1]{0}', space=sflag, size = 0x4, scoped, tag = 'scoped memory for tpu_custom_call.1']
    #allocation7 [shape = 'u8[24576]{0}', space=vmem, size = 0x6000, scoped, tag = 'input window, operand 2, single buffered']
    #allocation8 [shape = 'u8[8192]{0}', space=vmem, size = 0x2000, scoped, tag = 'input window, operand 3, single buffered']
    #allocation9 [shape = 's32[1]{0}', space=sflag, size = 0x4, scoped, tag = 'scoped memory for tpu_custom_call.1']
    #allocation10 [shape = 'u8[8192]{0}', space=vmem, size = 0x2000, scoped, tag = 'output window, operand 0']
    #allocation11 [shape = 'u8[8192]{0}', space=vmem, size = 0x2000, scoped, tag = 'output window, operand 1']
    #allocation12 [shape = 's32[2]{0}', space=sflag, size = 0x8, scoped, tag = 'scoped memory for tpu_custom_call.1']
    #allocation13 [shape = 'u8[8192]{0}', space=vmem, size = 0x2000, scoped, tag = 'output window, operand 2']
    %12 = vsyncpa [#allocation3], 0
    %s13 = scalar_lea.sflag [#allocation3], 1
    %14 = vsyncpa %s13, 0
    %15 = vsyncpa [#allocation6], 0
    %16 = vsyncpa [#allocation9], 0
    %17 = vsyncpa [#allocation4], 0
    %s18 = scalar_lea.sflag [#allocation4], 1
    %19 = vsyncpa %s18, 0
    %20 = vsyncpa [#allocation12], 0
    %s21 = scalar_lea.sflag [#allocation12], 1
    %22 = vsyncpa %s21, 0
    loop: start=0, step=1, limit=4
    $region2: #{tpu_custom_call.1} parent=1 // loop_pre_header
      _
    $region3: #{tpu_custom_call.1} parent=1 // loop_header
      %s24 = sphi 0, %s28
      %p25 = scmp.ge.s32.totalorder %s24, 4
      %s34 = sphi 0, %s36
      %s37 = sphi 0, %s34
      %s38 = sphi 0, %s37
      %s54 = sphi 0, %s38
      %s58 = sphi 0, %s58
      %s60 = sphi 0, %s58
      %s61 = sphi 0, %s60
      %s75 = sphi 0, %s61
      %s79 = sphi 0, %s79
      %s81 = sphi 0, %s79
      %s82 = sphi 0, %s81
      %s96 = sphi 0, %s82
      %s100 = sphi 0, %s100
      %s102 = sphi 0, %s100
      %s103 = sphi 0, %s102
      %s117 = sphi 0, %s103
      %s123 = sphi 0, %s125
      %s126 = sphi 0, %s123
      %s127 = sphi 0, %s126
      %s143 = sphi 0, %s127
      %s149 = sphi 0, %s151
      %s152 = sphi 0, %s149
      %s153 = sphi 0, %s152
      %s169 = sphi 0, %s153
      %s175 = sphi 0, %s177
      %s178 = sphi 0, %s175
      %s179 = sphi 0, %s178
      %s195 = sphi 0, %s179
    $region4: #{tpu_custom_call.1} parent=1 // loop_header_branch
      %27 = sbr.rel (%p25) target = $region8
    $region5: #{tpu_custom_call.1} parent=1 // loop_body
      %s29 = ssub.s32 %s24, 1
      %s30 = ssub.s32 %s24, 2
      %s31 = sadd.s32 %s24, 1
      %s32 = ssub.s32 %s24, %s31
      %p33 = scmp.eq.s32.totalorder %s32, 0
      %s35 = sadd.s32 %s34, 1
      %s36 = scalar_select %p33, %s34, %s35
      %p39 = pneg %p33
      %p40 = scmp.eq.s32.totalorder %s24, 1
      %p41 = por %p39, %p40
      %p42 = scmp.ne.s32.totalorder %s34, %s37
      %p43 = scmp.eq.s32.totalorder %s24, 0
      %p44 = por %p42, %p43
      %p45 = scmp.ne.s32.totalorder %s34, %s37
      %p46 = scmp.eq.s32.totalorder %s29, 1
      %p47 = por %p45, %p46
      %p48 = scmp.ne.s32.totalorder %s37, %s38
      %p49 = scmp.eq.s32.totalorder %s29, 0
      %p50 = por %p48, %p49
      %p51 = scmp.ne.s32.totalorder %s37, %s38
      %p52 = scmp.eq.s32.totalorder %s30, 1
      %p53 = por %p51, %p52
      %p55 = scmp.ne.s32.totalorder %s38, %s54
      %p56 = scmp.eq.s32.totalorder %s30, 0
      %p57 = por %p55, %p56
      %s59 = sadd.s32 %s58, 1
      %p62 = scmp.eq.s32.totalorder %s24, 1
      %p63 = scmp.ne.s32.totalorder %s58, %s60
      %p64 = scmp.eq.s32.totalorder %s24, 0
      %p65 = por %p63, %p64
      %p66 = scmp.ne.s32.totalorder %s58, %s60
      %p67 = scmp.eq.s32.totalorder %s29, 1
      %p68 = por %p66, %p67
      %p69 = scmp.ne.s32.totalorder %s60, %s61
      %p70 = scmp.eq.s32.totalorder %s29, 0
      %p71 = por %p69, %p70
      %p72 = scmp.ne.s32.totalorder %s60, %s61
      %p73 = scmp.eq.s32.totalorder %s30, 1
      %p74 = por %p72, %p73
      %p76 = scmp.ne.s32.totalorder %s61, %s75
      %p77 = scmp.eq.s32.totalorder %s30, 0
      %p78 = por %p76, %p77
      %s80 = sadd.s32 %s79, 1
      %p83 = scmp.eq.s32.totalorder %s24, 1
      %p84 = scmp.ne.s32.totalorder %s79, %s81
      %p85 = scmp.eq.s32.totalorder %s24, 0
      %p86 = por %p84, %p85
      %p87 = scmp.ne.s32.totalorder %s79, %s81
      %p88 = scmp.eq.s32.totalorder %s29, 1
      %p89 = por %p87, %p88
      %p90 = scmp.ne.s32.totalorder %s81, %s82
      %p91 = scmp.eq.s32.totalorder %s29, 0
      %p92 = por %p90, %p91
      %p93 = scmp.ne.s32.totalorder %s81, %s82
      %p94 = scmp.eq.s32.totalorder %s30, 1
      %p95 = por %p93, %p94
      %p97 = scmp.ne.s32.totalorder %s82, %s96
      %p98 = scmp.eq.s32.totalorder %s30, 0
      %p99 = por %p97, %p98
      %s101 = sadd.s32 %s100, 1
      %p104 = scmp.eq.s32.totalorder %s24, 1
      %p105 = scmp.ne.s32.totalorder %s100, %s102
      %p106 = scmp.eq.s32.totalorder %s24, 0
      %p107 = por %p105, %p106
      %p108 = scmp.ne.s32.totalorder %s100, %s102
      %p109 = scmp.eq.s32.totalorder %s29, 1
      %p110 = por %p108, %p109
      %p111 = scmp.ne.s32.totalorder %s102, %s103
      %p112 = scmp.eq.s32.totalorder %s29, 0
      %p113 = por %p111, %p112
      %p114 = scmp.ne.s32.totalorder %s102, %s103
      %p115 = scmp.eq.s32.totalorder %s30, 1
      %p116 = por %p114, %p115
      %p118 = scmp.ne.s32.totalorder %s103, %s117
      %p119 = scmp.eq.s32.totalorder %s30, 0
      %p120 = por %p118, %p119
      %s121 = ssub.s32 %s24, %s31
      %p122 = scmp.eq.s32.totalorder %s121, 0
      %s124 = sadd.s32 %s123, 1
      %s125 = scalar_select %p122, %s123, %s124
      %p128 = pneg %p122
      %p129 = scmp.eq.s32.totalorder %s24, 1
      %p130 = por %p128, %p129
      %p131 = scmp.ne.s32.totalorder %s123, %s126
      %p132 = scmp.eq.s32.totalorder %s24, 0
      %p133 = por %p131, %p132
      %p134 = scmp.ne.s32.totalorder %s123, %s126
      %p135 = scmp.eq.s32.totalorder %s29, 1
      %p136 = por %p134, %p135
      %p137 = scmp.ne.s32.totalorder %s126, %s127
      %p138 = scmp.eq.s32.totalorder %s29, 0
      %p139 = por %p137, %p138
      %p140 = scmp.ne.s32.totalorder %s126, %s127
      %p141 = scmp.eq.s32.totalorder %s30, 1
      %p142 = por %p140, %p141
      %p144 = scmp.ne.s32.totalorder %s127, %s143
      %p145 = scmp.eq.s32.totalorder %s30, 0
      %p146 = por %p144, %p145
      %s147 = ssub.s32 %s24, %s31
      %p148 = scmp.eq.s32.totalorder %s147, 0
      %s150 = sadd.s32 %s149, 1
      %s151 = scalar_select %p148, %s149, %s150
      %p154 = pneg %p148
      %p155 = scmp.eq.s32.totalorder %s24, 1
      %p156 = por %p154, %p155
      %p157 = scmp.ne.s32.totalorder %s149, %s152
      %p158 = scmp.eq.s32.totalorder %s24, 0
      %p159 = por %p157, %p158
      %p160 = scmp.ne.s32.totalorder %s149, %s152
      %p161 = scmp.eq.s32.totalorder %s29, 1
      %p162 = por %p160, %p161
      %p163 = scmp.ne.s32.totalorder %s152, %s153
      %p164 = scmp.eq.s32.totalorder %s29, 0
      %p165 = por %p163, %p164
      %p166 = scmp.ne.s32.totalorder %s152, %s153
      %p167 = scmp.eq.s32.totalorder %s30, 1
      %p168 = por %p166, %p167
      %p170 = scmp.ne.s32.totalorder %s153, %s169
      %p171 = scmp.eq.s32.totalorder %s30, 0
      %p172 = por %p170, %p171
      %s173 = ssub.s32 %s24, %s31
      %p174 = scmp.eq.s32.totalorder %s173, 0
      %s176 = sadd.s32 %s175, 1
      %s177 = scalar_select %p174, %s175, %s176
      %p180 = pneg %p174
      %p181 = scmp.eq.s32.totalorder %s24, 1
      %p182 = por %p180, %p181
      %p183 = scmp.ne.s32.totalorder %s175, %s178
      %p184 = scmp.eq.s32.totalorder %s24, 0
      %p185 = por %p183, %p184
      %p186 = scmp.ne.s32.totalorder %s175, %s178
      %p187 = scmp.eq.s32.totalorder %s29, 1
      %p188 = por %p186, %p187
      %p189 = scmp.ne.s32.totalorder %s178, %s179
      %p190 = scmp.eq.s32.totalorder %s29, 0
      %p191 = por %p189, %p190
      %p192 = scmp.ne.s32.totalorder %s178, %s179
      %p193 = scmp.eq.s32.totalorder %s30, 1
      %p194 = por %p192, %p193
      %p196 = scmp.ne.s32.totalorder %s179, %s195
      %p197 = scmp.eq.s32.totalorder %s30, 0
      %p198 = por %p196, %p197
      %p199 = scmp.le.s32.totalorder 1, %s24
      %p200 = scmp.lt.s32.totalorder %s24, 3
      %p201 = pnand %p199, %p200
      %p202 = pneg %p201
      // Predicated region
      $region9: #{tpu_custom_call.1} parent=5 // pred_check
        _
      $region10: #{tpu_custom_call.1} parent=5 // pred_check_branch
        %204 = sbr.rel (%p201) target = $region12
      $region11: #{tpu_custom_call.1} parent=5 // pred_region
        %s205 = ssub.s32 %s24, 1
        // Predicated region
        $region13: #{tpu_custom_call.1} parent=11 // pred_check
          %p206 = pneg %p71
        $region14: #{tpu_custom_call.1} parent=11 // pred_check_branch
          %208 = sbr.rel (%p206) target = $region16
        $region15: #{tpu_custom_call.1} parent=11 // pred_region
          %s210 = ssub.s32 256, 256
          %211 = vsyncadd [#allocation6], %s210
          %s212 = sshll.u32 [#allocation5], 4
          %s213 = int_to_ptr.vmem [resolvable:$true] %s212
          %218 = dma.hbm_to_vmem [thread:$0]  %s1, 256, %s213, [#allocation6], 64, 64, 4
        $region16: #{tpu_custom_call.1} parent=11 // pred_fallthru
          _
        // Predicated region
        $region17: #{tpu_custom_call.1} parent=11 // pred_check
          %p219 = pneg %p92
        $region18: #{tpu_custom_call.1} parent=11 // pred_check_branch
          %221 = sbr.rel (%p219) target = $region20
        $region19: #{tpu_custom_call.1} parent=11 // pred_region
          %s223 = ssub.s32 768, 768
          %224 = vsyncadd [#allocation6], %s223
          %s225 = sshll.u32 [#allocation7], 4
          %s226 = int_to_ptr.vmem [resolvable:$true] %s225
          %231 = dma.hbm_to_vmem [thread:$0]  %s2, 768, %s226, [#allocation6], 192, 192, 12
        $region20: #{tpu_custom_call.1} parent=11 // pred_fallthru
          _
        // Predicated region
        $region21: #{tpu_custom_call.1} parent=11 // pred_check
          %p232 = pneg %p113
        $region22: #{tpu_custom_call.1} parent=11 // pred_check_branch
          %234 = sbr.rel (%p232) target = $region24
        $region23: #{tpu_custom_call.1} parent=11 // pred_region
          %s236 = ssub.s32 256, 256
          %237 = vsyncadd [#allocation9], %s236
          %s238 = sshll.u32 [#allocation8], 4
          %s239 = int_to_ptr.vmem [resolvable:$true] %s238
          %244 = dma.hbm_to_vmem [thread:$0]  %s3, 256, %s239, [#allocation9], 128, 128, 8
        $region24: #{tpu_custom_call.1} parent=11 // pred_fallthru
          _
      $region12: #{tpu_custom_call.1} parent=5 // pred_fallthru
        _
      %p245 = scmp.lt.s32.totalorder %s24, 2
      // Predicated region
      $region25: #{tpu_custom_call.1} parent=5 // pred_check
        %p246 = pneg %p245
      $region26: #{tpu_custom_call.1} parent=5 // pred_check_branch
        %248 = sbr.rel (%p246) target = $region28
      $region27: #{tpu_custom_call.1} parent=5 // pred_region
        // Predicated region
        $region29: #{tpu_custom_call.1} parent=27 // pred_check
          %p249 = pneg %p44
        $region30: #{tpu_custom_call.1} parent=27 // pred_check_branch
          %251 = sbr.rel (%p249) target = $region32
        $region31: #{tpu_custom_call.1} parent=27 // pred_region
          %s252 = sand.u32 %s34, 1
          %s253 = scalar_lea.sflag [#allocation3], %s252
          %s254 = sand.u32 %s34, 1
          %s255 = smul.addr %s254, 8
          %s256 = scalar_lea.vmem [#allocation2], %s255
          %s258 = ssub.s32 128, 128
          %259 = vsyncadd %s253, %s258
          %s260 = smul.addr %s24, 128
          %s261 = scalar_lea.hbm %s0, %s260
          %s263 = sshll.u32 %s256, 4
          %s264 = int_to_ptr.vmem [resolvable:$true] %s263
          %266 = dma.hbm_to_vmem [thread:$0]  %s261, 128, %s264, %s253
        $region32: #{tpu_custom_call.1} parent=27 // pred_fallthru
          _
      $region28: #{tpu_custom_call.1} parent=5 // pred_fallthru
        _
      %p267 = scmp.le.s32.totalorder 1, %s24
      %p268 = scmp.lt.s32.totalorder %s24, 3
      %p269 = pnand %p267, %p268
      %p270 = pneg %p269
      // Predicated region
      $region33: #{tpu_custom_call.1} parent=5 // pred_check
        _
      $region34: #{tpu_custom_call.1} parent=5 // pred_check_branch
        %272 = sbr.rel (%p269) target = $region36
      $region35: #{tpu_custom_call.1} parent=5 // pred_region
        %s273 = ssub.s32 %s24, 1
        %s274 = sand.u32 %s37, 1
        %s275 = scalar_lea.sflag [#allocation3], %s274
        %s276 = sand.u32 %s37, 1
        %s277 = smul.addr %s276, 8
        %s278 = scalar_lea.vmem [#allocation2], %s277
        // Predicated region
        $region37: #{tpu_custom_call.1} parent=35 // pred_check
          %p279 = pneg %p50
        $region38: #{tpu_custom_call.1} parent=35 // pred_check_branch
          %281 = sbr.rel (%p279) target = $region40
        $region39: #{tpu_custom_call.1} parent=35 // pred_region
          %282 = dma.done %s275, 128
        $region40: #{tpu_custom_call.1} parent=35 // pred_fallthru
          _
        // Predicated region
        $region41: #{tpu_custom_call.1} parent=35 // pred_check
          %p283 = pneg %p71
        $region42: #{tpu_custom_call.1} parent=35 // pred_check_branch
          %285 = sbr.rel (%p283) target = $region44
        $region43: #{tpu_custom_call.1} parent=35 // pred_region
          %286 = dma.done [#allocation6], 256
        $region44: #{tpu_custom_call.1} parent=35 // pred_fallthru
          _
        // Predicated region
        $region45: #{tpu_custom_call.1} parent=35 // pred_check
          %p287 = pneg %p92
        $region46: #{tpu_custom_call.1} parent=35 // pred_check_branch
          %289 = sbr.rel (%p287) target = $region48
        $region47: #{tpu_custom_call.1} parent=35 // pred_region
          %290 = dma.done [#allocation6], 768
        $region48: #{tpu_custom_call.1} parent=35 // pred_fallthru
          _
        // Predicated region
        $region49: #{tpu_custom_call.1} parent=35 // pred_check
          %p291 = pneg %p113
        $region50: #{tpu_custom_call.1} parent=35 // pred_check_branch
          %293 = sbr.rel (%p291) target = $region52
        $region51: #{tpu_custom_call.1} parent=35 // pred_region
          %294 = dma.done [#allocation9], 256
        $region52: #{tpu_custom_call.1} parent=35 // pred_fallthru
          _
        %s295 = sand.u32 %s37, 1
        %s296 = scalar_lea.sflag [#allocation3], %s295
        %s297 = sand.u32 %s37, 1
        %s298 = smul.addr %s297, 8
        %s299 = scalar_lea.vmem [#allocation2], %s298
        %p300 = pneg %p50
        %p301 = pneg %p47
        %p302 = pneg %p71
        %p303 = pneg %p68
        %p304 = pneg %p92
        %p305 = pneg %p89
        %p306 = pneg %p113
        %p307 = pneg %p110
        %p308 = pneg %p139
        %p309 = pneg %p136
        %s310 = sand.u32 %s126, 1
        %s311 = scalar_lea.sflag [#allocation4], %s310
        %s312 = sand.u32 %s126, 1
        %s313 = smul.addr %s312, 8
        %s314 = scalar_lea.vmem [#allocation10], %s313
        %p315 = pneg %p165
        %p316 = pneg %p162
        %s317 = sand.u32 %s29, 1
        %s318 = scalar_lea.sflag [#allocation12], %s317
        %s319 = sand.u32 %s152, 1
        %s320 = smul.addr %s319, 8
        %s321 = scalar_lea.vmem [#allocation11], %s320
        %p322 = pneg %p191
        %p323 = pneg %p188
        %s324 = sand.u32 %s29, 1
        %s325 = scalar_lea.sflag [#allocation12], %s324
        %s326 = sand.u32 %s178, 1
        %s327 = smul.addr %s326, 8
        %s328 = scalar_lea.vmem [#allocation13], %s327
        %v330 = vld [vmem:[#allocation8] sm:$0x1]
        %v331 = vld [vmem:[#allocation8 + $0x1] sm:$0x1]
        %v332 = vld [vmem:[#allocation8 + $0x2] sm:$0x1]
        %v333 = vld [vmem:[#allocation8 + $0x3] sm:$0x1]
        %v334 = vld [vmem:[#allocation8 + $0x4] sm:$0x1]
        %v335 = vld [vmem:[#allocation8 + $0x5] sm:$0x1]
        %v336 = vld [vmem:[#allocation8 + $0x6] sm:$0x1]
        %v337 = vld [vmem:[#allocation8 + $0x7] sm:$0x1]
        %v338 = vld [vmem:[#allocation8 + $0x8] sm:$0x1]
        %v339 = vld [vmem:[%s278] sm:$0xff]
        %vm340 = vcmp.ne.f32.partialorder %v339, %v339
        %v341 = vsel %vm340, 0.0, %v339
        %vm342 = vcmp.eq.f32.partialorder %v341, inf
        %v343 = vsel %vm342, 1.0, %v341
        %vm344 = vcmp.eq.f32.partialorder %v343, -inf
        %v345 = vsel %vm344, -1.0, %v343
        %v346 = vld [vmem:[#allocation5] sm:$0xf]
        %v347 = vld [vmem:[#allocation5 + $0x4] sm:$0xf]
        %v348 = vld [vmem:[#allocation5 + $0x8] sm:$0xf]
        %v349 = vld [vmem:[#allocation5 + $0xc] sm:$0xf]
        %v350 = vpack.c.bf16 %v345, %v345
        %v351 = vlaneseq
        %v352 = vshrl.u32 %v351, 7
        %v353 = vsub.s32 0, %v352
        %v354 = vrot.slane %v330, %v353
        %v359 = vunpack.c.l.b16 %v346
        %v360 = vunpack.c.l.b16 %v347
        %v361 = vunpack.c.l.b16 %v348
        %v362 = vunpack.c.l.b16 %v349
        %v363 = vpack.c.b16 %v360, %v359
        %v364 = vpack.c.b16 %v362, %v361
        %vm367 = vcmask 261120
        %v369 = vsel %vm367, %v350, 0
        %371 = vmatprep.subr.bf16.mxu0 0
        %372 = vmatpush1.bf16.msra.mxu0 0
        %373 = vmatprep.subr.bf16.mxu0 0
        %374 = vmatpush1.bf16.msra.mxu0 0
        %375 = vmatprep.subr.bf16.mxu0 0
        %376 = vmatpush1.bf16.msra.mxu0 0
        %377 = vmatprep.subr.bf16.mxu0 0
        %378 = vmatpush1.bf16.msra.mxu0 0
        %379 = vmatprep.subr.bf16.mxu0 0
        %380 = vmatpush1.bf16.msra.mxu0 0
        %381 = vmatprep.subr.bf16.mxu0 0
        %382 = vmatpush1.bf16.msra.mxu0 0
        %383 = vmatprep.subr.bf16.mxu0 0
        %384 = vmatpush1.bf16.msra.mxu0 %v364
        %385 = vmatprep.subr.bf16.mxu0 0
        %386 = vmatpush1.bf16.msra.mxu0 %v363
        %387 = vmatprep.subr.bf16.mxu0 0
        %388 = vmatpush2.bf16.msra.mxu0 0
        %389 = vmatprep.subr.bf16.mxu0 0
        %390 = vmatpush2.bf16.msra.mxu0 0
        %391 = vmatprep.subr.bf16.mxu0 0
        %392 = vmatpush2.bf16.msra.mxu0 0
        %393 = vmatprep.subr.bf16.mxu0 0
        %394 = vmatpush2.bf16.msra.mxu0 0
        %395 = vmatprep.subr.bf16.mxu0 0
        %396 = vmatpush2.bf16.msra.mxu0 0
        %397 = vmatprep.subr.bf16.mxu0 0
        %398 = vmatpush2.bf16.msra.mxu0 0
        %399 = vmatprep.subr.bf16.mxu0 0
        %400 = vmatpush2.bf16.msra.mxu0 0
        %401 = vmatprep.subr.bf16.mxu0 0
        %402 = vmatpush2.bf16.msra.mxu0 0
        %403 = vmatprep.mubr.bf16.mxu0 0
        %404 = vmatmul.mubr.bf16.gmra.mxu0 %v369
        %v405 = vpop.f32.mrf.mxu0
        %v406 = vadd.f32 %v354, %v405
        %v407 = vpop.f32.mrf.mxu0
        %v408 = vpop.f32.mrf.mxu0
        %v409 = vpop.f32.mrf.mxu0
        %410 = vdwg.mxu0
        %v411 = vsel %vm367, %v406, 0.0
        %412 = vadd.xlane.f32.xlu0 %v411
        %v413 = vpop.xlane.xlu0 %412
        %v414 = vrcp.pop 32.0
        %v415 = vmul.f32 %v413, %v414
        %v416 = vmul.f32 %v406, %v406
        %v417 = vsel %vm367, %v416, 0.0
        %418 = vadd.xlane.f32.xlu0 %v417
        %v419 = vpop.xlane.xlu0 %418
        %v420 = vmul.f32 %v419, %v414
        %v421 = vmul.f32 %v415, %v415
        %v422 = vsub.f32 %v420, %v421
        %v423 = vmax.f32 %v422, 0.0
        %v424 = vsub.f32 %v406, %v415
        %v425 = vadd.f32 %v423, 1e-05
        %v426 = vrsqrt.pop %v425
        %v427 = vmul.f32 %v424, %v426
        %v428 = vlaneseq
        %v429 = vshrl.u32 %v428, 7
        %v430 = vsub.s32 0, %v429
        %v431 = vrot.slane %v331, %v430
        %v432 = vmul.f32 %v427, %v431
        %v433 = vlaneseq
        %v434 = vshrl.u32 %v433, 7
        %v435 = vsub.s32 0, %v434
        %v436 = vrot.slane %v332, %v435
        %v437 = vadd.f32 %v432, %v436
        %v438 = vmul.f32 %v437, 0.5
        %v439 = vmul.f32 %v437, 0.044715
        %v440 = vmul.f32 %v439, %v437
        %v441 = vmul.f32 %v440, %v437
        %v442 = vadd.f32 %v437, %v441
        %v443 = vmul.f32 %v442, 0.7978846
        %v444 = vtanh.pop %v443
        %v445 = vadd.f32 %v444, 1.0
        %v446 = vmul.f32 %v438, %v445
        %v447 = vsel %vm367, %v446, 0.0
        %448 = vadd.xlane.f32.xlu0 %v447
        %v449 = vpop.xlane.xlu0 %448
        %v450 = vmul.f32 %v449, %v414
        %v451 = vmul.f32 %v446, %v446
        %v452 = vsel %vm367, %v451, 0.0
        %453 = vadd.xlane.f32.xlu0 %v452
        %v454 = vpop.xlane.xlu0 %453
        %v455 = vmul.f32 %v454, %v414
        %v456 = vmul.f32 %v450, %v450
        %v457 = vsub.f32 %v455, %v456
        %v458 = vmax.f32 %v457, 0.0
        %v459 = vmul.f32 %v458, 1.032258
        %v460 = vrsqrt.pop %v459
        %v461 = vmul.f32 %v459, %v460
        %vm462 = vcmp.eq.f32.partialorder %v459, inf
        %v463 = vsel %vm462, %v459, %v461
        %vm464 = vcmp.eq.f32.partialorder %v459, 0.0
        %v465 = vand.u32 %v459, 2147483648
        %v466 = vsel %vm464, %v465, %v463
        %v467 = vadd.f32 %v466, 1e-06
        %v468 = vsub.f32 %v446, %v450
        %v469 = vrcp.pop %v467
        %v470 = vmul.f32 %v468, %v469
        %v471 = vld [vmem:[#allocation7] sm:$0xff]
        %v472 = vld [vmem:[#allocation7 + $0x8] sm:$0xf]
        %v473 = vld [vmem:[#allocation7 + $0xc] sm:$0xff]
        %v474 = vld [vmem:[#allocation7 + $0x14] sm:$0xf]
        %v475 = vld [vmem:[#allocation7 + $0x18] sm:$0xff]
        %v476 = vld [vmem:[#allocation7 + $0x20] sm:$0xf]
        %v477 = vld [vmem:[#allocation7 + $0x24] sm:$0xff]
        %v478 = vld [vmem:[#allocation7 + $0x2c] sm:$0xf]
        %v479 = vpack.c.bf16 %v470, %v470
        %v488 = vunpack.c.l.b16 %v471
        %v489 = vunpack.c.h.b16 %v471
        %v490 = vunpack.c.l.b16 %v472
        %v491 = vunpack.c.l.b16 %v473
        %v492 = vunpack.c.h.b16 %v473
        %v493 = vunpack.c.l.b16 %v474
        %v494 = vunpack.c.l.b16 %v475
        %v495 = vunpack.c.h.b16 %v475
        %v496 = vunpack.c.l.b16 %v476
        %v497 = vunpack.c.l.b16 %v477
        %v498 = vunpack.c.h.b16 %v477
        %v499 = vunpack.c.l.b16 %v478
        %v500 = vpack.c.b16 %v491, %v488
        %v501 = vpack.c.b16 %v492, %v489
        %v502 = vpack.c.b16 %v493, %v490
        %v503 = vpack.c.b16 %v497, %v494
        %v504 = vpack.c.b16 %v498, %v495
        %v505 = vpack.c.b16 %v499, %v496
        %v513 = vsel %vm367, %v479, 0
        %515 = vmatprep.subr.bf16.mxu0 0
        %516 = vmatpush1.bf16.msra.mxu0 0
        %517 = vmatprep.subr.bf16.mxu0 0
        %518 = vmatpush1.bf16.msra.mxu0 0
        %519 = vmatprep.subr.bf16.mxu0 0
        %520 = vmatpush1.bf16.msra.mxu0 0
        %521 = vmatprep.subr.bf16.mxu0 0
        %522 = vmatpush1.bf16.msra.mxu0 0
        %523 = vmatprep.subr.bf16.mxu0 0
        %524 = vmatpush1.bf16.msra.mxu0 0
        %525 = vmatprep.subr.bf16.mxu0 0
        %526 = vmatpush1.bf16.msra.mxu0 0
        %527 = vmatprep.subr.bf16.mxu0 %v504
        %528 = vmatpush1.bf16.msra.mxu0 %v503
        %529 = vmatprep.subr.bf16.mxu0 %v501
        %530 = vmatpush1.bf16.msra.mxu0 %v500
        %531 = vmatprep.subr.bf16.mxu0 0
        %532 = vmatpush2.bf16.msra.mxu0 0
        %533 = vmatprep.subr.bf16.mxu0 0
        %534 = vmatpush2.bf16.msra.mxu0 0
        %535 = vmatprep.subr.bf16.mxu0 0
        %536 = vmatpush2.bf16.msra.mxu0 0
        %537 = vmatprep.subr.bf16.mxu0 0
        %538 = vmatpush2.bf16.msra.mxu0 0
        %539 = vmatprep.subr.bf16.mxu0 0
        %540 = vmatpush2.bf16.msra.mxu0 0
        %541 = vmatprep.subr.bf16.mxu0 0
        %542 = vmatpush2.bf16.msra.mxu0 0
        %543 = vmatprep.subr.bf16.mxu0 0
        %544 = vmatpush2.bf16.msra.mxu0 0
        %545 = vmatprep.subr.bf16.mxu0 0
        %546 = vmatpush2.bf16.msra.mxu0 0
        %547 = vmatprep.mubr.bf16.mxu0 0
        %548 = vmatmul.mubr.bf16.gmra.mxu0 %v513
        %v549 = vpop.f32.mrf.mxu0
        %v550 = vadd.f32 0.0, %v549
        %v551 = vpop.f32.mrf.mxu0
        %v552 = vadd.f32 0.0, %v551
        %v553 = vpop.f32.mrf.mxu0
        %v554 = vpop.f32.mrf.mxu0
        %555 = vdwg.mxu0
        %556 = vmatprep.subr.bf16.mxu0 0
        %557 = vmatpush1.bf16.msra.mxu0 0
        %558 = vmatprep.subr.bf16.mxu0 0
        %559 = vmatpush1.bf16.msra.mxu0 0
        %560 = vmatprep.subr.bf16.mxu0 0
        %561 = vmatpush1.bf16.msra.mxu0 0
        %562 = vmatprep.subr.bf16.mxu0 0
        %563 = vmatpush1.bf16.msra.mxu0 0
        %564 = vmatprep.subr.bf16.mxu0 0
        %565 = vmatpush1.bf16.msra.mxu0 0
        %566 = vmatprep.subr.bf16.mxu0 0
        %567 = vmatpush1.bf16.msra.mxu0 0
        %568 = vmatprep.subr.bf16.mxu0 0
        %569 = vmatpush1.bf16.msra.mxu0 %v505
        %570 = vmatprep.subr.bf16.mxu0 0
        %571 = vmatpush1.bf16.msra.mxu0 %v502
        %572 = vmatprep.subr.bf16.mxu0 0
        %573 = vmatpush2.bf16.msra.mxu0 0
        %574 = vmatprep.subr.bf16.mxu0 0
        %575 = vmatpush2.bf16.msra.mxu0 0
        %576 = vmatprep.subr.bf16.mxu0 0
        %577 = vmatpush2.bf16.msra.mxu0 0
        %578 = vmatprep.subr.bf16.mxu0 0
        %579 = vmatpush2.bf16.msra.mxu0 0
        %580 = vmatprep.subr.bf16.mxu0 0
        %581 = vmatpush2.bf16.msra.mxu0 0
        %582 = vmatprep.subr.bf16.mxu0 0
        %583 = vmatpush2.bf16.msra.mxu0 0
        %584 = vmatprep.subr.bf16.mxu0 0
        %585 = vmatpush2.bf16.msra.mxu0 0
        %586 = vmatprep.subr.bf16.mxu0 0
        %587 = vmatpush2.bf16.msra.mxu0 0
        %588 = vmatprep.mubr.bf16.mxu0 0
        %589 = vmatmul.mubr.bf16.gmra.mxu0 %v513
        %v590 = vpop.f32.mrf.mxu0
        %v591 = vadd.f32 0.0, %v590
        %v592 = vpop.f32.mrf.mxu0
        %v593 = vpop.f32.mrf.mxu0
        %v594 = vpop.f32.mrf.mxu0
        %595 = vdwg.mxu0
        %v596 = vlaneseq
        %v597 = vshrl.u32 %v596, 7
        %v598 = vsub.s32 0, %v597
        %v599 = vrot.slane %v333, %v598
        %v600 = vadd.f32 %v550, %v599
        %v601 = vsel %vm367, %v600, 0.0
        %602 = vadd.xlane.f32.xlu0 %v601
        %v603 = vpop.xlane.xlu0 %602
        %v604 = vmul.f32 %v603, %v414
        %v605 = vmul.f32 %v600, %v600
        %v606 = vsel %vm367, %v605, 0.0
        %607 = vadd.xlane.f32.xlu0 %v606
        %v608 = vpop.xlane.xlu0 %607
        %v609 = vmul.f32 %v608, %v414
        %v610 = vmul.f32 %v604, %v604
        %v611 = vsub.f32 %v609, %v610
        %v612 = vmax.f32 %v611, 0.0
        %v613 = vsub.f32 %v600, %v604
        %v614 = vadd.f32 %v612, 1e-05
        %v615 = vrsqrt.pop %v614
        %v616 = vmul.f32 %v613, %v615
        %v617 = vlaneseq
        %v618 = vshrl.u32 %v617, 7
        %v619 = vsub.s32 0, %v618
        %v620 = vrot.slane %v334, %v619
        %v621 = vmul.f32 %v616, %v620
        %v622 = vlaneseq
        %v623 = vshrl.u32 %v622, 7
        %v624 = vsub.s32 0, %v623
        %v625 = vrot.slane %v335, %v624
        %v626 = vadd.f32 %v621, %v625
        %627 = vst.msk [vmem:[%s314] sm:$0xff] %vm367, %v626
        %v628 = vlaneseq
        %v629 = vshrl.u32 %v628, 7
        %v630 = vsub.s32 0, %v629
        %v631 = vrot.slane %v336, %v630
        %v632 = vadd.f32 %v552, %v631
        %v633 = vsel %vm367, %v632, 0.0
        %634 = vadd.xlane.f32.xlu0 %v633
        %v635 = vpop.xlane.xlu0 %634
        %v636 = vmul.f32 %v635, %v414
        %v637 = vmul.f32 %v632, %v632
        %v638 = vsel %vm367, %v637, 0.0
        %639 = vadd.xlane.f32.xlu0 %v638
        %v640 = vpop.xlane.xlu0 %639
        %v641 = vmul.f32 %v640, %v414
        %v642 = vmul.f32 %v636, %v636
        %v643 = vsub.f32 %v641, %v642
        %v644 = vmax.f32 %v643, 0.0
        %v645 = vsub.f32 %v632, %v636
        %v646 = vadd.f32 %v644, 1e-05
        %v647 = vrsqrt.pop %v646
        %v648 = vmul.f32 %v645, %v647
        %v649 = vlaneseq
        %v650 = vshrl.u32 %v649, 7
        %v651 = vsub.s32 0, %v650
        %v652 = vrot.slane %v337, %v651
        %v653 = vmul.f32 %v648, %v652
        %v654 = vlaneseq
        %v655 = vshrl.u32 %v654, 7
        %v656 = vsub.s32 0, %v655
        %v657 = vrot.slane %v338, %v656
        %v658 = vadd.f32 %v653, %v657
        %659 = vst.msk [vmem:[%s321] sm:$0xff] %vm367, %v658
        %660 = vst [vmem:[%s328] sm:$0xff] %v591
        %s661 = sand.u32 %s126, 1
        %s662 = scalar_lea.sflag [#allocation4], %s661
        %s663 = sand.u32 %s126, 1
        %s664 = smul.addr %s663, 8
        %s665 = scalar_lea.vmem [#allocation10], %s664
        %s666 = sand.u32 %s29, 1
        %s667 = scalar_lea.sflag [#allocation12], %s666
        %s668 = sand.u32 %s152, 1
        %s669 = smul.addr %s668, 8
        %s670 = scalar_lea.vmem [#allocation11], %s669
        %s671 = sand.u32 %s29, 1
        %s672 = scalar_lea.sflag [#allocation12], %s671
        %s673 = sand.u32 %s178, 1
        %s674 = smul.addr %s673, 8
        %s675 = scalar_lea.vmem [#allocation13], %s674
        // Predicated region
        $region53: #{tpu_custom_call.1} parent=35 // pred_check
          %p676 = pneg %p136
        $region54: #{tpu_custom_call.1} parent=35 // pred_check_branch
          %678 = sbr.rel (%p676) target = $region56
        $region55: #{tpu_custom_call.1} parent=35 // pred_region
          %s680 = ssub.s32 128, 128
          %681 = vsyncadd %s662, %s680
          %s682 = smul.addr %s29, 128
          %s683 = scalar_lea.hbm %s4, %s682
          %s685 = sshll.u32 %s665, 4
          %s686 = int_to_ptr.vmem [resolvable:$true] %s685
          %688 = dma.vmem_to_hbm [thread:$0]  %s686, 128, %s683, %s662
        $region56: #{tpu_custom_call.1} parent=35 // pred_fallthru
          _
        // Predicated region
        $region57: #{tpu_custom_call.1} parent=35 // pred_check
          %p689 = pneg %p162
        $region58: #{tpu_custom_call.1} parent=35 // pred_check_branch
          %691 = sbr.rel (%p689) target = $region60
        $region59: #{tpu_custom_call.1} parent=35 // pred_region
          %s693 = ssub.s32 128, 128
          %694 = vsyncadd %s667, %s693
          %s695 = smul.addr %s29, 128
          %s696 = scalar_lea.hbm %s5, %s695
          %s698 = sshll.u32 %s670, 4
          %s699 = int_to_ptr.vmem [resolvable:$true] %s698
          %701 = dma.vmem_to_hbm [thread:$0]  %s699, 128, %s696, %s667
        $region60: #{tpu_custom_call.1} parent=35 // pred_fallthru
          _
        // Predicated region
        $region61: #{tpu_custom_call.1} parent=35 // pred_check
          %p702 = pneg %p188
        $region62: #{tpu_custom_call.1} parent=35 // pred_check_branch
          %704 = sbr.rel (%p702) target = $region64
        $region63: #{tpu_custom_call.1} parent=35 // pred_region
          %s706 = ssub.s32 128, 128
          %707 = vsyncadd %s672, %s706
          %s708 = smul.addr %s29, 128
          %s709 = scalar_lea.hbm %s6, %s708
          %s711 = sshll.u32 %s675, 4
          %s712 = int_to_ptr.vmem [resolvable:$true] %s711
          %714 = dma.vmem_to_hbm [thread:$0]  %s712, 128, %s709, %s672
        $region64: #{tpu_custom_call.1} parent=35 // pred_fallthru
          _
      $region36: #{tpu_custom_call.1} parent=5 // pred_fallthru
        _
      %p715 = scmp.le.s32.totalorder 2, %s24
      // Predicated region
      $region65: #{tpu_custom_call.1} parent=5 // pred_check
        %p716 = pneg %p715
      $region66: #{tpu_custom_call.1} parent=5 // pred_check_branch
        %718 = sbr.rel (%p716) target = $region68
      $region67: #{tpu_custom_call.1} parent=5 // pred_region
        %s719 = ssub.s32 %s24, 2
        // Predicated region
        $region69: #{tpu_custom_call.1} parent=67 // pred_check
          %p720 = pneg %p142
        $region70: #{tpu_custom_call.1} parent=67 // pred_check_branch
          %722 = sbr.rel (%p720) target = $region72
        $region71: #{tpu_custom_call.1} parent=67 // pred_region
          %s723 = sand.u32 %s127, 1
          %s724 = scalar_lea.sflag [#allocation4], %s723
          %s725 = sand.u32 %s127, 1
          %s726 = smul.addr %s725, 8
          %s727 = scalar_lea.vmem [#allocation10], %s726
          %728 = dma.done %s724, 128
        $region72: #{tpu_custom_call.1} parent=67 // pred_fallthru
          _
        // Predicated region
        $region73: #{tpu_custom_call.1} parent=67 // pred_check
          %p729 = pneg %p168
        $region74: #{tpu_custom_call.1} parent=67 // pred_check_branch
          %731 = sbr.rel (%p729) target = $region76
        $region75: #{tpu_custom_call.1} parent=67 // pred_region
          %s732 = sand.u32 %s30, 1
          %s733 = scalar_lea.sflag [#allocation12], %s732
          %s734 = sand.u32 %s153, 1
          %s735 = smul.addr %s734, 8
          %s736 = scalar_lea.vmem [#allocation11], %s735
          %737 = dma.done %s733, 128
        $region76: #{tpu_custom_call.1} parent=67 // pred_fallthru
          _
        // Predicated region
        $region77: #{tpu_custom_call.1} parent=67 // pred_check
          %p738 = pneg %p194
        $region78: #{tpu_custom_call.1} parent=67 // pred_check_branch
          %740 = sbr.rel (%p738) target = $region80
        $region79: #{tpu_custom_call.1} parent=67 // pred_region
          %s741 = sand.u32 %s30, 1
          %s742 = scalar_lea.sflag [#allocation12], %s741
          %s743 = sand.u32 %s179, 1
          %s744 = smul.addr %s743, 8
          %s745 = scalar_lea.vmem [#allocation13], %s744
          %746 = dma.done %s742, 128
        $region80: #{tpu_custom_call.1} parent=67 // pred_fallthru
          _
      $region68: #{tpu_custom_call.1} parent=5 // pred_fallthru
        _
    $region6: #{tpu_custom_call.1} parent=1 // loop_footer
      %s28 = sadd.s32 1, %s24
    $region7: #{tpu_custom_call.1} parent=1 // loop_footer_branch
      %23 = sbr.rel target = $region3
    $region8: #{tpu_custom_call.1} parent=1 // loop_exit
      _
    %747 = vsyncpa [#allocation3], 1
    %s748 = scalar_lea.sflag [#allocation3], 1
    %749 = vsyncpa %s748, 1
    %750 = vsyncpa [#allocation6], 1
    %751 = vsyncpa [#allocation9], 1
    %752 = vsyncpa [#allocation4], 1
    %s753 = scalar_lea.sflag [#allocation4], 1
    %754 = vsyncpa %s753, 1
    %755 = vsyncpa [#allocation12], 1
    %s756 = scalar_lea.sflag [#allocation12], 1
    %757 = vsyncpa %s756, 1

</llo_original>
